<compile_context>
chip_gen: v5e
topology: v5e:2x2
jax: 0.10.0
libtpu: 0.0.40
codegen_flags: <defaults>
</compile_context>

<pallas_src>
import math

import jax
import jax.numpy as jnp
from jax.experimental import pallas as pl
from jax.experimental.pallas import tpu as pltpu


def _round_up(x, m):
    return ((x + m - 1) // m) * m


# ---------------------------------------------------------------------------
# Prologue kernel: mask + masked weight, computed once (hoisted off the
# per-tile critical path).  Weight layout: (Cout_pad, K_pad), K row-major over
# (kh, kw, cin).  All mask arithmetic in f32.
# ---------------------------------------------------------------------------
def _make_mask_weight_kernel(cout_real, k_real):
    inv_cout = 1.0 / float(cout_real)
    inv_k = 1.0 / float(k_real)

    def kernel(thr_ref, w_ref, mw_ref):
        w = w_ref[...]                                              # (Cout_pad, K_pad) f32
        # per-(kh,kw,cin) mean of |W| over output channels; zero-padded rows /
        # columns contribute nothing, and we divide by the *real* Cout.
        absmean = jnp.sum(jnp.abs(w), axis=0, keepdims=True) * inv_cout   # (1, K_pad)
        thr = jnp.maximum(thr_ref[0], 0.0)       # torch clamps a negative threshold to 0
        mask = (absmean - thr > 0.0).astype(jnp.float32)            # BinaryStep forward
        ratio = jnp.sum(mask) * inv_k            # padded K columns always give mask 0
        # if ratio <= 1%: threshold reset to 0 and the mask recomputed
        mask = jnp.where(ratio <= 0.01, (absmean > 0.0).astype(jnp.float32), mask)
        mw_ref[...] = (w * mask).astype(mw_ref.dtype)   # einsum('ijkl,jkl->ijkl') equiv.

    return kernel


# ---------------------------------------------------------------------------
# Main kernel: out[c, m] = sum_k mw[c, k] * patches[k, m] + bias[c]
# Output tile (Cout_pad, tm) -> lane-dense (tm is a multiple of 128) stores.
# ---------------------------------------------------------------------------
def _conv_matmul_kernel(w_ref, p_ref, b_ref, o_ref, acc_ref):
    k = pl.program_id(1)

    @pl.when(k == 0)
    def _init():
        acc_ref[...] = jnp.zeros_like(acc_ref)

    acc_ref[...] += jnp.dot(w_ref[...], p_ref[...],
                            preferred_element_type=jnp.float32)

    @pl.when(k == pl.num_programs(1) - 1)
    def _finalize():
        o_ref[...] = (acc_ref[...] + b_ref[...]).astype(o_ref.dtype)


def masked_conv2d(x_nchw, weight_oihw, bias, threshold, *,
                  stride=1, padding=0, dilation=1,
                  tm=1024, compute_dtype=None):
    """Forward of MaskedConv2d (groups=1, bias=True)."""
    # TODO(synk): groups > 1 path not implemented (module instance uses groups=1).
    # TODO(synk): torch mutates self.threshold / caches self.mask in-place; that
    #             stateful side effect is folded into pure computation here.
    # TODO(synk): im2col is still materialized in HBM by XLA glue; fusing it into
    #             the kernel (grid over (m_tile, kh*kw) indexing NHWC x directly)
    #             would cut the ~KH*KW x patch write/read HBM traffic.
    N, Cin, H, W = x_nchw.shape
    Cout, Cin_w, KH, KW = weight_oihw.shape
    assert Cin_w == Cin, "only groups=1 supported"

    if compute_dtype is None:
        compute_dtype = x_nchw.dtype
    out_dtype = x_nchw.dtype
    itemsize = jnp.dtype(compute_dtype).itemsize
    out_itemsize = jnp.dtype(out_dtype).itemsize

    # ---- im2col in transposed (K, M) layout (plain-JAX glue) ----
    x = jnp.transpose(x_nchw, (0, 2, 3, 1))                         # NHWC
    x = jnp.pad(x, ((0, 0), (padding, padding), (padding, padding), (0, 0)))
    Hp, Wp = x.shape[1], x.shape[2]
    OH = (Hp - dilation * (KH - 1) - 1) // stride + 1
    OW = (Wp - dilation * (KW - 1) - 1) // stride + 1
    M = N * OH * OW
    K = KH * KW * Cin

    cols = []
    for i in range(KH):
        for j in range(KW):
            sl = x[:, i * dilation: i * dilation + (OH - 1) * stride + 1: stride,
                      j * dilation: j * dilation + (OW - 1) * stride + 1: stride, :]
            cols.append(jnp.transpose(sl, (3, 0, 1, 2)).reshape(Cin, M))
    patches_t = jnp.concatenate(cols, axis=0)                        # (K, M)

    # ---- lane / sublane alignment (zero padding is numerically exact) ----
    k_pad = _round_up(K, 128)                 # lane-aligned contraction dim
    cout_pad = _round_up(Cout, 8)             # sublane-aligned output channels
    tm_eff = _round_up(min(tm, _round_up(M, 128)), 128)
    m_pad = _round_up(M, tm_eff)

    patches_t = jnp.pad(patches_t, ((0, k_pad - K), (0, m_pad - M)))
    patches_t = patches_t.astype(compute_dtype)

    # weight (Cout, Cin, KH, KW) -> (Cout, KH, KW, Cin) -> (Cout, K), padded.
    w_ok = jnp.transpose(weight_oihw, (0, 2, 3, 1)).reshape(Cout, K).astype(jnp.float32)
    w_ok = jnp.pad(w_ok, ((0, cout_pad - Cout), (0, k_pad - K)))
    b2 = jnp.pad(bias.reshape(Cout, 1).astype(jnp.float32),
                 ((0, cout_pad - Cout), (0, 0)))
    thr = threshold.reshape(1).astype(jnp.float32)

    # ---- prologue: masked weight computed once ----
    mw = pl.pallas_call(
        _make_mask_weight_kernel(Cout, K),
        out_shape=jax.ShapeDtypeStruct((cout_pad, k_pad), compute_dtype),
        grid_spec=pltpu.PrefetchScalarGridSpec(
            num_scalar_prefetch=1,                       # threshold -> SMEM
            grid=(1,),
            in_specs=[pl.BlockSpec((cout_pad, k_pad), lambda i, thr_ref: (0, 0))],
            out_specs=pl.BlockSpec((cout_pad, k_pad), lambda i, thr_ref: (0, 0)),
        ),
        compiler_params=pltpu.CompilerParams(dimension_semantics=("arbitrary",)),
    )(thr, w_ok)

    # ---- K-reduction tiling for the main matmul ----
    tk = 128
    for cand in (1024, 512, 256, 128):
        if k_pad % cand == 0 and cand * tm_eff * itemsize <= 4 * 1024 * 1024:
            tk = cand
            break
    m_tiles = m_pad // tm_eff
    k_tiles = k_pad // tk

    vmem_need = (2 * tk * tm_eff * itemsize            # double-buffered patch tiles
                 + 2 * cout_pad * tk * itemsize        # double-buffered weight tiles
                 + 2 * cout_pad * tm_eff * out_itemsize
                 + cout_pad * tm_eff * 4               # accumulator scratch
                 + 4 * cout_pad)
    vmem_limit = int(min(max(32 * 1024 * 1024, 2 * vmem_need), 64 * 1024 * 1024))

    cost = pl.CostEstimate(
        flops=2 * m_pad * k_pad * cout_pad,
        transcendentals=0,
        bytes_accessed=int(k_pad * m_pad * itemsize + cout_pad * k_pad * itemsize
                           + cout_pad * m_pad * out_itemsize),
    )

    out_t = pl.pallas_call(
        _conv_matmul_kernel,
        out_shape=jax.ShapeDtypeStruct((cout_pad, m_pad), out_dtype),
        grid_spec=pltpu.PrefetchScalarGridSpec(
            num_scalar_prefetch=0,
            grid=(m_tiles, k_tiles),
            in_specs=[
                pl.BlockSpec((cout_pad, tk), lambda i, k: (0, k)),   # masked weight
                pl.BlockSpec((tk, tm_eff), lambda i, k: (k, i)),     # patches (K, M)
                pl.BlockSpec((cout_pad, 1), lambda i, k: (0, 0)),    # bias
            ],
            out_specs=pl.BlockSpec((cout_pad, tm_eff), lambda i, k: (0, i)),
            scratch_shapes=[pltpu.VMEM((cout_pad, tm_eff), jnp.float32)],
        ),
        compiler_params=pltpu.CompilerParams(
            dimension_semantics=("parallel", "arbitrary"),
            vmem_limit_bytes=vmem_limit,
        ),
        cost_estimate=cost,
    )(mw, patches_t, b2)

    out = out_t[:Cout, :M].reshape(Cout, N, OH, OW)
    return jnp.transpose(out, (1, 0, 2, 3))                          # back to NCHW


if __name__ == "__main__":
    key = jax.random.PRNGKey(0)
    N, Cin, H, W = 2, 4, 16, 16
    Cout, KH, KW = 8, 3, 3
    stride, padding, dilation = 1, 1, 1

    k_x, k_w, k_b = jax.random.split(key, 3)
    x = jax.random.normal(k_x, (N, Cin, H, W), dtype=jnp.float32)

    # nn.init.kaiming_uniform_(a=sqrt(5)) -> U(-1/sqrt(fan_in), 1/sqrt(fan_in))
    fan_in = Cin * KH * KW
    bound = 1.0 / math.sqrt(fan_in)
    weight = jax.random.uniform(k_w, (Cout, Cin, KH, KW),
                                minval=-bound, maxval=bound, dtype=jnp.float32)
    bias = jax.random.uniform(k_b, (Cout,),
                              minval=-bound, maxval=bound, dtype=jnp.float32)
    threshold = jnp.zeros((1,), dtype=jnp.float32)    # reset_parameters fills 0

    # pure-JAX reference to validate the Pallas kernels
    absmean = jnp.mean(jnp.abs(weight), axis=0)
    thr = jnp.maximum(threshold[0], 0.0)
    mask = (absmean - thr > 0.0).astype(jnp.float32)
    ratio = jnp.sum(mask) / mask.size
    mask = jnp.where(ratio <= 0.01, (absmean > 0.0).astype(jnp.float32), mask)
    mw_ref = weight * mask[None]
    ref = jax.lax.conv_general_dilated(
        x, mw_ref, window_strides=(stride, stride),
        padding=[(padding, padding), (padding, padding)],
        rhs_dilation=(dilation, dilation),
        dimension_numbers=("NCHW", "OIHW", "NCHW"),
    ) + bias[None, :, None, None]

    oh = (H + 2 * padding - dilation * (KH - 1) - 1) // stride + 1
    ow = (W + 2 * padding - dilation * (KW - 1) - 1) // stride + 1

    # f32 path
    out = jax.block_until_ready(
        masked_conv2d(x, weight, bias, threshold,
                      stride=stride, padding=padding, dilation=dilation))
    assert out.shape == (N, Cout, oh, ow), out.shape
    assert jnp.allclose(out, ref, rtol=1e-4, atol=1e-4)

    # bf16 MXU-input path (mask math stays f32 in the prologue kernel)
    out_bf16 = jax.block_until_ready(
        masked_conv2d(x, weight, bias, threshold,
                      stride=stride, padding=padding, dilation=dilation,
                      compute_dtype=jnp.bfloat16))
    assert out_bf16.shape == (N, Cout, oh, ow), out_bf16.shape
    assert jnp.allclose(out_bf16, ref, rtol=5e-2, atol=5e-2)

    print("KERNEL_OK")
</pallas_src>

<mosaic_0001>
module attributes {stable_mosaic.version = 11 : i64} {
  func.func @kernel(%arg0: i32, %arg1: memref<1xf32, #tpu.memory_space<smem>>, %arg2: memref<8x128xf32, #tpu.memory_space<vmem>>, %arg3: memref<8x128xf32, #tpu.memory_space<vmem>>) attributes {dimension_semantics = [#tpu.dimension_semantics<arbitrary>], iteration_bounds = array<i64: 1>, scalar_prefetch = 1 : i64, scratch_operands = 0 : i64, tpu.core_type = #tpu.core_type<tc>, window_params = [{pipeline_mode = #tpu.pipeline_mode<synchronous>, transform_indices = @transform_0, window_bounds = array<i64: 8, 128>}, {pipeline_mode = #tpu.pipeline_mode<synchronous>, transform_indices = @transform_1, window_bounds = array<i64: 8, 128>}]} {
    %c0 = arith.constant 0 : index
    %c0_0 = arith.constant 0 : index
    %0 = vector.load %arg2[%c0, %c0_0] : memref<8x128xf32, #tpu.memory_space<vmem>>, vector<8x128xf32>
    %1 = math.absf %0 : vector<8x128xf32>
    %cst = arith.constant dense<0.000000e+00> : vector<128xf32>
    %2 = vector.multi_reduction <add>, %1, %cst [0] : vector<8x128xf32> to vector<128xf32>
    %3 = vector.shape_cast %2 : vector<128xf32> to vector<1x128xf32>
    %cst_1 = arith.constant 1.250000e-01 : f32
    %4 = vector.broadcast %cst_1 : f32 to vector<1x128xf32>
    %5 = arith.mulf %3, %4 : vector<1x128xf32>
    %c0_2 = arith.constant 0 : index
    %6 = memref.load %arg1[%c0_2] : memref<1xf32, #tpu.memory_space<smem>>
    %cst_3 = arith.constant 0.000000e+00 : f32
    %7 = arith.maximumf %6, %cst_3 : f32
    %8 = vector.broadcast %7 : f32 to vector<1x128xf32>
    %9 = arith.subf %5, %8 : vector<1x128xf32>
    %cst_4 = arith.constant 0.000000e+00 : f32
    %10 = vector.broadcast %cst_4 : f32 to vector<1x128xf32>
    %11 = arith.cmpf ogt, %9, %10 : vector<1x128xf32>
    %12 = arith.extui %11 : vector<1x128xi1> to vector<1x128xi32>
    %13 = arith.sitofp %12 : vector<1x128xi32> to vector<1x128xf32>
    %14 = vector.shape_cast %13 : vector<1x128xf32> to vector<1x1x128xf32>
    %cst_5 = arith.constant dense<0.000000e+00> : vector<1xf32>
    %15 = vector.multi_reduction <add>, %14, %cst_5 [1, 2] : vector<1x1x128xf32> to vector<1xf32>
    %16 = vector.shape_cast %15 : vector<1xf32> to vector<1x1x1xf32>
    %17 = vector.extract %16[0, 0, 0] : f32 from vector<1x1x1xf32>
    %cst_6 = arith.constant 0.027777778 : f32
    %18 = arith.mulf %17, %cst_6 : f32
    %cst_7 = arith.constant 0.00999999977 : f32
    %19 = arith.cmpf ole, %18, %cst_7 : f32
    %cst_8 = arith.constant 0.000000e+00 : f32
    %20 = vector.broadcast %cst_8 : f32 to vector<1x128xf32>
    %21 = arith.cmpf ogt, %5, %20 : vector<1x128xf32>
    %22 = arith.extui %21 : vector<1x128xi1> to vector<1x128xi32>
    %23 = arith.sitofp %22 : vector<1x128xi32> to vector<1x128xf32>
    %24 = arith.select %19, %23, %13 : vector<1x128xf32>
    %25 = vector.broadcast %24 : vector<1x128xf32> to vector<8x128xf32>
    %26 = arith.mulf %0, %25 : vector<8x128xf32>
    %c0_9 = arith.constant 0 : index
    %c0_10 = arith.constant 0 : index
    %27 = vector.load %arg3[%c0_9, %c0_10] : memref<8x128xf32, #tpu.memory_space<vmem>>, vector<8x128xf32>
    tpu.vector_store %arg3[%c0_9, %c0_10], %26 {strides = array<i32>} : memref<8x128xf32, #tpu.memory_space<vmem>>, vector<8x128xf32>,
    return
  }
  func.func @transform_0(%arg0: i32, %arg1: memref<1xf32, #tpu.memory_space<smem>>) -> (i32, i32) {
    %c0_i32 = arith.constant 0 : i32
    %c0_i32_0 = arith.constant 0 : i32
    %c0_i32_1 = arith.constant 0 : i32
    return %c0_i32, %c0_i32_0 : i32, i32
  }
  func.func @transform_1(%arg0: i32, %arg1: memref<1xf32, #tpu.memory_space<smem>>) -> (i32, i32) {
    %c0_i32 = arith.constant 0 : i32
    %c0_i32_0 = arith.constant 0 : i32
    %c0_i32_1 = arith.constant 0 : i32
    return %c0_i32, %c0_i32_0 : i32, i32
  }
}

</mosaic_0001>

<llo_original>
// kernel: tpu_custom_call.1
$region0: #{tpu_custom_call.1}
  #allocation0 [shape = 'u32[]', space=smem, size = 0x4, offset = 0x4, fixed_abs, tag = 'smem constant byte address 0x4 - core index']
  #allocation1 [shape = 'u32[72,128]{1,0:T(1,128)}', space=vmem, size = 0x9000, scoped, tag = 'internal scratch']
  #allocation2 [shape = 's32[1]{0}', space=sflag, size = 0x4, scoped, tag = 'scoped memory for tpu_custom_call.1']
  #allocation3 [shape = 'f32[1]{0:T(128)S(6)}', space=smem, size = 0x200, scoped, tag = 'prefetched SMEM operand 0']
  %s0 = inlined_call_operand.<no memory space> [shape: f32[1], index: 0, kind: input, shape index: {}]
  %s1 = inlined_call_operand.hbm [shape: f32[8,128], index: 1, kind: input, shape index: {}]
  %s2 = inlined_call_operand.hbm [shape: f32[8,128], index: 2, kind: output, shape index: {}]
  %s3 = sld [smem:[#allocation0]]
  $region18: #{tpu_custom_call.1} parent=0
    _
  %s5 = ssub.s32 1, %s3
  %s6 = scalar_select 0, %s5, %s3
  %7 = sst [smem:[#allocation3]] %s0
  $region1: #{tpu_custom_call.1} parent=0
    #allocation4 [shape = 'u8[4096]{0}', space=vmem, size = 0x1000, scoped, tag = 'input window, operand 1, single buffered']
    #allocation5 [shape = 's32[1]{0}', space=sflag, size = 0x4, scoped, tag = 'scoped memory for tpu_custom_call.1']
    #allocation6 [shape = 's32[1]{0}', space=sflag, size = 0x4, scoped, tag = 'scoped memory for tpu_custom_call.1']
    #allocation7 [shape = 'u8[4096]{0}', space=vmem, size = 0x1000, scoped, tag = 'output window, operand 0, single buffered']
    %8 = vsyncpa [#allocation5], 0
    %9 = vsyncpa [#allocation6], 0
    // Predicated region
    $region2: #{tpu_custom_call.1} parent=1 // pred_check
      _
    $region3: #{tpu_custom_call.1} parent=1 // pred_check_branch
      %11 = sbr.rel (0) target = $region5
    $region4: #{tpu_custom_call.1} parent=1 // pred_region
      %13 = vsyncadd [#allocation5], 0
      %s15 = sshll.u32 %s1, 4
      %s16 = int_to_ptr.hbm [resolvable:$true] %s15
      %s17 = sshll.u32 [#allocation4], 4
      %s18 = int_to_ptr.vmem [resolvable:$true] %s17
      %20 = dma.hbm_to_vmem [thread:$0]  %s16, 128, %s18, [#allocation5]
    $region5: #{tpu_custom_call.1} parent=1 // pred_fallthru
      _
    // Predicated region
    $region6: #{tpu_custom_call.1} parent=1 // pred_check
      _
    $region7: #{tpu_custom_call.1} parent=1 // pred_check_branch
      %22 = sbr.rel (0) target = $region9
    $region8: #{tpu_custom_call.1} parent=1 // pred_region
      %24 = dma.done [#allocation5], 128
    $region9: #{tpu_custom_call.1} parent=1 // pred_fallthru
      _
    %v25 = vld [vmem:[#allocation4] sm:$0xff]
    %v26 = vand.u32 2147483647, %v25
    %v27 = vrot.slane %v26, 4
    %v28 = vadd.f32 %v26, %v27
    %v29 = vrot.slane %v28, 2
    %v30 = vadd.f32 %v28, %v29
    %v31 = vrot.slane %v30, 1
    %v32 = vadd.f32 %v30, %v31
    %v33 = vmul.f32 %v32, 0.125
    %s34 = sld [smem:[#allocation3]]
    %s35 = smax.f32 %s34, 0.0
    %v36 = vstv %s35
    %v37 = vsub.f32 %v33, %v36
    %vm38 = vcmp.gt.f32.partialorder %v37, 0.0
    %v39 = vsel %vm38, 1, 0
    %v40 = vcvt.s32.f32 %v39
    %vm41 = vcmask 1040384
    %v42 = vsel %vm41, %v40, 0.0
    %43 = vadd.xlane.f32.xlu0 %v42
    %v44 = vpop.xlane.xlu0 %43
    %v45 = vrot.slane %v44, 4
    %v46 = vadd.f32 %v44, %v45
    %v47 = vrot.slane %v46, 2
    %v48 = vadd.f32 %v46, %v47
    %v49 = vrot.slane %v48, 1
    %v50 = vadd.f32 %v48, %v49
    %s51 = vtos %v50
    %s52 = smul.f32 %s51, 0.027777778
    %p53 = scmp.le.f32.partialorder %s52, 0.01
    %vm54 = vcmp.gt.f32.partialorder %v33, 0.0
    %v55 = vsel %vm54, 1, 0
    %v56 = vcvt.s32.f32 %v55
    %s57 = scalar_select %p53, 1, 0
    %v58 = vstv %s57
    %vm59 = vcmp.eq.s32.totalorder %v58, 1
    %v60 = vsel %vm59, %v56, %v40
    %v61 = vmul.f32 %v25, %v60
    %62 = vst [vmem:[#allocation7] sm:$0xff] %v61
    // Predicated region
    $region10: #{tpu_custom_call.1} parent=1 // pred_check
      _
    $region11: #{tpu_custom_call.1} parent=1 // pred_check_branch
      %64 = sbr.rel (0) target = $region13
    $region12: #{tpu_custom_call.1} parent=1 // pred_region
      %66 = vsyncadd [#allocation6], 0
      %s68 = sshll.u32 [#allocation7], 4
      %s69 = int_to_ptr.vmem [resolvable:$true] %s68
      %s70 = sshll.u32 %s2, 4
      %s71 = int_to_ptr.hbm [resolvable:$true] %s70
      %73 = dma.vmem_to_hbm [thread:$0]  %s69, 128, %s71, [#allocation6]
    $region13: #{tpu_custom_call.1} parent=1 // pred_fallthru
      _
    // Predicated region
    $region14: #{tpu_custom_call.1} parent=1 // pred_check
      _
    $region15: #{tpu_custom_call.1} parent=1 // pred_check_branch
      %75 = sbr.rel (0) target = $region17
    $region16: #{tpu_custom_call.1} parent=1 // pred_region
      %77 = dma.done [#allocation6], 128
    $region17: #{tpu_custom_call.1} parent=1 // pred_fallthru
      _
    %78 = vsyncpa [#allocation5], 1
    %79 = vsyncpa [#allocation6], 1

</llo_original>
